<compile_context>
chip_gen: v5e
topology: v5e:2x2
jax: 0.10.0
libtpu: 0.0.40
codegen_flags: <defaults>
</compile_context>

<pallas_src>
import functools

import jax
import jax.numpy as jnp
from jax.experimental import pallas as pl
from jax.experimental.pallas import tpu as pltpu


# ---------------------------------------------------------------------------
# small helpers
# ---------------------------------------------------------------------------
_MXU_MIN_WORK = 1 << 20                 # M*N*K below this -> plain XLA (launch/pad overhead wins)
_VMEM_LIMIT = 32 * 1024 * 1024          # safe on v5e/v6e (128 MiB phys) and v7x (64 MiB phys)


def _round_up(x, m):
    return ((x + m - 1) // m) * m


def _apply_act(x, act):
    if act == 'relu':
        return jnp.maximum(x, 0.0)
    if act == 'lrelu':
        return jnp.where(x >= 0, x, 0.2 * x)
    if act == 'prelu':                  # nn.PReLU() default single slope init = 0.25
        return jnp.where(x >= 0, x, 0.25 * x)
    if act == 'selu':
        return jax.nn.selu(x)
    if act == 'tanh':
        return jnp.tanh(x)
    return x


# ---------------------------------------------------------------------------
# Pallas kernel 1: tiled matmul + bias + fused activation (the nn.Linear)
#   bf16 operands, f32 accumulation directly into the VMEM-resident output block.
# ---------------------------------------------------------------------------
def _linear_kernel(x_ref, w_ref, b_ref, o_ref, *, activation):
    k = pl.program_id(2)

    @pl.when(k == 0)
    def _():
        o_ref[...] = jnp.zeros_like(o_ref)

    o_ref[...] += jnp.dot(x_ref[...], w_ref[...], preferred_element_type=jnp.float32)

    @pl.when(k == pl.num_programs(2) - 1)
    def _():
        # f32 epilogue (bias + activation) — works on every generation (v5e has no bf16 VPU)
        o_ref[...] = _apply_act(o_ref[...] + b_ref[...], activation)


@functools.lru_cache(maxsize=None)
def _get_linear_kernel(activation):
    return functools.partial(_linear_kernel, activation=activation)


def prepare_linear_params(w, b):
    """One-time weight layout prep: (OC,IC) -> transposed, tile-padded, bf16; bias -> (1,Np) f32."""
    OC, IC = w.shape
    Kp = _round_up(IC, 128)
    Np = _round_up(OC, 128)
    w_t = jnp.pad(w.T.astype(jnp.float32), ((0, Kp - IC), (0, Np - OC))).astype(jnp.bfloat16)
    b_p = jnp.pad(b.astype(jnp.float32).reshape(1, OC), ((0, 0), (0, Np - OC)))
    return w_t, b_p


def linear_bias_act_pallas(x, w_t, b_p, out_dim, activation='none'):
    """x:(M,K) f32, w_t:(Kp,Np) pre-padded bf16, b_p:(1,Np) f32 -> (M,out_dim) f32."""
    M, K = x.shape
    Kp, Np = w_t.shape

    Mp = _round_up(M, 128)
    # 256-aligned tiles fill the v6e/v7x 256x256 MXU; keep >=2 iterations on the parallel
    # M axis (megacore on v7x) by only bumping tm when Mp >= 512.  v5e stays happy at 128.
    tm = 256 if (Mp % 256 == 0 and Mp >= 512) else 128
    tn = 256 if (Np % 256 == 0 and Np >= 512) else 128
    tk = next(c for c in (512, 256, 128) if Kp % c == 0)   # deep K tile -> fewer acc revisits

    x_p = jnp.pad(x.astype(jnp.float32), ((0, Mp - M), (0, Kp - K))).astype(jnp.bfloat16)

    out = pl.pallas_call(
        _get_linear_kernel(activation),
        out_shape=jax.ShapeDtypeStruct((Mp, Np), jnp.float32),
        grid_spec=pltpu.PrefetchScalarGridSpec(
            num_scalar_prefetch=0,
            grid=(Mp // tm, Np // tn, Kp // tk),
            in_specs=[
                pl.BlockSpec((tm, tk), lambda i, j, k: (i, k)),
                pl.BlockSpec((tk, tn), lambda i, j, k: (k, j)),
                pl.BlockSpec((1, tn), lambda i, j, k: (0, j)),
            ],
            out_specs=pl.BlockSpec((tm, tn), lambda i, j, k: (i, j)),
        ),
        compiler_params=pltpu.CompilerParams(
            dimension_semantics=("parallel", "parallel", "arbitrary"),
            vmem_limit_bytes=_VMEM_LIMIT),
    )(x_p, w_t, b_p)
    return out[:M, :out_dim]


# ---------------------------------------------------------------------------
# Pallas kernel 2: MUNIT custom LayerNorm over a (B, N) tensor + fused activation
#   per-row mean, unbiased std (torch.std), y = (x-mean)/(std+eps), per-feature affine.
# ---------------------------------------------------------------------------
def _layer_norm_kernel(x_ref, g_ref, b_ref, o_ref, *, n, eps, activation):
    x = x_ref[...]
    mean = jnp.sum(x, axis=-1, keepdims=True) * (1.0 / n)
    d = x - mean
    var = jnp.sum(d * d, axis=-1, keepdims=True) * (1.0 / (n - 1.0))   # unbiased (torch.std)
    y = d / (jnp.sqrt(var) + eps)
    o_ref[...] = _apply_act(y * g_ref[...] + b_ref[...], activation)


@functools.lru_cache(maxsize=None)
def _get_ln_kernel(n, eps, activation):
    return functools.partial(_layer_norm_kernel, n=n, eps=eps, activation=activation)


def layer_norm_act(x, gamma, beta, eps=1e-5, activation='none'):
    M, N = x.shape
    g = gamma.astype(jnp.float32)
    b = beta.astype(jnp.float32)

    if M == 1:
        # reference module's batch-1 branch: statistics over the whole tensor
        mean = jnp.mean(x)
        std = jnp.std(x, ddof=1)
        return _apply_act((x - mean) / (std + eps) * g[None, :] + b[None, :], activation)

    if N % 128 != 0 or M < 8:
        # not lane-dense / too few rows: micro-op, let XLA handle it (no pallas launch)
        mean = jnp.mean(x, axis=1, keepdims=True)
        std = jnp.std(x, axis=1, ddof=1, keepdims=True)
        return _apply_act((x - mean) / (std + eps) * g[None, :] + b[None, :], activation)

    Mp = _round_up(M, 8)
    bm = 128 if Mp % 128 == 0 else 8      # lane-dense (N mult of 128) + >=8 sublanes per block
    x_p = jnp.pad(x, ((0, Mp - M), (0, 0)))

    out = pl.pallas_call(
        _get_ln_kernel(float(N), float(eps), activation),
        out_shape=jax.ShapeDtypeStruct((Mp, N), jnp.float32),
        grid_spec=pltpu.PrefetchScalarGridSpec(
            num_scalar_prefetch=0,
            grid=(Mp // bm,),
            in_specs=[
                pl.BlockSpec((bm, N), lambda i: (i, 0)),
                pl.BlockSpec((1, N), lambda i: (0, 0)),
                pl.BlockSpec((1, N), lambda i: (0, 0)),
            ],
            out_specs=pl.BlockSpec((bm, N), lambda i: (i, 0)),
        ),
        compiler_params=pltpu.CompilerParams(
            dimension_semantics=("parallel",),
            vmem_limit_bytes=_VMEM_LIMIT),
    )(x_p, g.reshape(1, N), b.reshape(1, N))
    return out[:M]


# ---------------------------------------------------------------------------
# LinearBlock: Linear -> optional norm -> optional activation
# ---------------------------------------------------------------------------
class LinearBlock:
    """JAX/Pallas counterpart of the PyTorch LinearBlock."""

    # TODO(synk): norm in {'sn','bn','in'} not ported — spectral norm needs stateful power
    # iteration, BatchNorm1d needs running stats / batch-stat training semantics, and
    # InstanceNorm1d on a 2-D input has ill-defined (unbatched) semantics.

    def __init__(self, key, input_dim, output_dim, norm='none', activation='relu'):
        assert norm in ('none', 'ln'), f"norm '{norm}' not implemented in this Pallas port"
        assert activation in ('relu', 'lrelu', 'prelu', 'selu', 'tanh', 'none')
        k_w, k_b, k_g = jax.random.split(key, 3)
        bound = 1.0 / (input_dim ** 0.5)                    # nn.Linear default init range
        self.w = jax.random.uniform(k_w, (output_dim, input_dim), jnp.float32, -bound, bound)
        self.b = jax.random.uniform(k_b, (output_dim,), jnp.float32, -bound, bound)
        self.norm = norm
        self.activation = activation
        self.input_dim = input_dim
        self.output_dim = output_dim
        if norm == 'ln':
            self.gamma = jax.random.uniform(k_g, (output_dim,), jnp.float32)   # .uniform_()
            self.beta = jnp.zeros((output_dim,), jnp.float32)
        # hoisted, one-time weight layout prep (transpose + pad + bf16 cast)
        self.w_t, self.b_p = prepare_linear_params(self.w, self.b)

    def __call__(self, x):
        act_mm = self.activation if self.norm == 'none' else 'none'
        M, K = x.shape
        if M * K * self.output_dim < _MXU_MIN_WORK or M < 8:
            # sub-MXU-sized matmul: plain XLA (padding M=2 to a 128-row tile wastes the MXU)
            y = _apply_act(x @ self.w.T + self.b, act_mm)
        else:
            y = linear_bias_act_pallas(x, self.w_t, self.b_p, self.output_dim, act_mm)
        if self.norm == 'ln':
            y = layer_norm_act(y, self.gamma, self.beta, eps=1e-5, activation=self.activation)
        return y


# ---------------------------------------------------------------------------
# pure-JAX reference (f32) for correctness checking
# ---------------------------------------------------------------------------
def linear_block_ref(block, x):
    y = x @ block.w.T + block.b
    if block.norm == 'ln':
        if y.shape[0] == 1:
            mean = jnp.mean(y)
            std = jnp.std(y, ddof=1)
        else:
            mean = jnp.mean(y, axis=1, keepdims=True)
            std = jnp.std(y, axis=1, ddof=1, keepdims=True)
        y = (y - mean) / (std + 1e-5)
        y = y * block.gamma[None, :] + block.beta[None, :]
    return _apply_act(y, block.activation)


# ---------------------------------------------------------------------------
if __name__ == "__main__":
    key = jax.random.PRNGKey(0)
    k1, k2, k3, kx1, kx2 = jax.random.split(key, 5)

    # 1) MXU-sized LinearBlock(256 -> 512), norm='none', relu  -> Pallas tiled matmul
    blk_a = LinearBlock(k1, 256, 512, norm='none', activation='relu')
    x_big = jax.random.normal(kx1, (256, 256), jnp.float32)

    # 2) MXU-sized LinearBlock(256 -> 512), norm='ln', tanh    -> Pallas matmul + Pallas LN+tanh
    blk_b = LinearBlock(k2, 256, 512, norm='ln', activation='tanh')

    # 3) tiny LinearBlock(32 -> 64), batch=2, lrelu            -> routed to plain XLA by threshold
    blk_c = LinearBlock(k3, 32, 64, norm='none', activation='lrelu')
    x_small = jax.random.normal(kx2, (2, 32), jnp.float32)

    out_a = jax.block_until_ready(jax.jit(blk_a.__call__)(x_big))
    out_b = jax.block_until_ready(jax.jit(blk_b.__call__)(x_big))
    out_c = jax.block_until_ready(jax.jit(blk_c.__call__)(x_small))

    ref_a = linear_block_ref(blk_a, x_big)
    ref_b = linear_block_ref(blk_b, x_big)
    ref_c = linear_block_ref(blk_c, x_small)

    assert out_a.shape == (256, 512), out_a.shape
    assert out_b.shape == (256, 512), out_b.shape
    assert out_c.shape == (2, 64), out_c.shape
    assert bool(jnp.all(jnp.isfinite(out_a)))
    assert bool(jnp.all(jnp.isfinite(out_b)))
    assert bool(jnp.all(jnp.isfinite(out_c)))
    # bf16 MXU operands with f32 accumulation -> loose tolerance vs the f32 reference
    assert float(jnp.max(jnp.abs(out_a - ref_a))) < 5e-2, float(jnp.max(jnp.abs(out_a - ref_a)))
    assert float(jnp.max(jnp.abs(out_b - ref_b))) < 5e-2, float(jnp.max(jnp.abs(out_b - ref_b)))
    assert float(jnp.max(jnp.abs(out_c - ref_c))) < 1e-2, float(jnp.max(jnp.abs(out_c - ref_c)))

    print("KERNEL_OK")
</pallas_src>

<mosaic_0001>
module attributes {stable_mosaic.version = 11 : i64} {
  func.func @_linear_kernel(%arg0: i32, %arg1: i32, %arg2: i32, %arg3: memref<128x256xbf16, #tpu.memory_space<vmem>>, %arg4: memref<256x256xbf16, #tpu.memory_space<vmem>>, %arg5: memref<1x256xf32, #tpu.memory_space<vmem>>, %arg6: memref<128x256xf32, #tpu.memory_space<vmem>>) attributes {dimension_semantics = [#tpu.dimension_semantics<parallel>, #tpu.dimension_semantics<parallel>, #tpu.dimension_semantics<arbitrary>], iteration_bounds = array<i64: 2, 2, 1>, scalar_prefetch = 0 : i64, scratch_operands = 0 : i64, tpu.core_type = #tpu.core_type<tc>, window_params = [{transform_indices = @transform_0, window_bounds = array<i64: 128, 256>}, {transform_indices = @transform_1, window_bounds = array<i64: 256, 256>}, {transform_indices = @transform_2, window_bounds = array<i64: 1, 256>}, {transform_indices = @transform_3, window_bounds = array<i64: 128, 256>}]} {
    %c0_i32 = arith.constant 0 : i32
    %0 = arith.cmpi eq, %arg2, %c0_i32 : i32
    %1 = arith.extui %0 : i1 to i32
    %c0_i32_0 = arith.constant 0 : i32
    %2 = arith.cmpi ne, %1, %c0_i32_0 : i32
    scf.if %2 {
      %cst_10 = arith.constant 0.000000e+00 : f32
      %12 = vector.broadcast %cst_10 : f32 to vector<128x256xf32>
      %c0_11 = arith.constant 0 : index
      %c0_12 = arith.constant 0 : index
      %13 = vector.load %arg6[%c0_11, %c0_12] : memref<128x256xf32, #tpu.memory_space<vmem>>, vector<128x256xf32>
      tpu.vector_store %arg6[%c0_11, %c0_12], %12 {strides = array<i32>} : memref<128x256xf32, #tpu.memory_space<vmem>>, vector<128x256xf32>,
    } else {
    }
    %c0 = arith.constant 0 : index
    %c0_1 = arith.constant 0 : index
    %3 = vector.load %arg6[%c0, %c0_1] : memref<128x256xf32, #tpu.memory_space<vmem>>, vector<128x256xf32>
    %c0_2 = arith.constant 0 : index
    %c0_3 = arith.constant 0 : index
    %4 = vector.load %arg3[%c0_2, %c0_3] : memref<128x256xbf16, #tpu.memory_space<vmem>>, vector<128x256xbf16>
    %c0_4 = arith.constant 0 : index
    %c0_5 = arith.constant 0 : index
    %5 = vector.load %arg4[%c0_4, %c0_5] : memref<256x256xbf16, #tpu.memory_space<vmem>>, vector<256x256xbf16>
    %cst = arith.constant dense<0.000000e+00> : vector<128x256xf32>
    %6 = tpu.matmul %4, %5, %cst {dimension_numbers = #tpu.dot_dimension_numbers<[1], [0], [0], [1], [0, 0, 1, 1], [], []>} : vector<128x256xbf16>, vector<256x256xbf16>, vector<128x256xf32> -> vector<128x256xf32>
    %7 = arith.addf %3, %6 : vector<128x256xf32>
    %c0_6 = arith.constant 0 : index
    %c0_7 = arith.constant 0 : index
    %8 = vector.load %arg6[%c0_6, %c0_7] : memref<128x256xf32, #tpu.memory_space<vmem>>, vector<128x256xf32>
    tpu.vector_store %arg6[%c0_6, %c0_7], %7 {strides = array<i32>} : memref<128x256xf32, #tpu.memory_space<vmem>>, vector<128x256xf32>,
    %c0_i32_8 = arith.constant 0 : i32
    %9 = arith.cmpi eq, %arg2, %c0_i32_8 : i32
    %10 = arith.extui %9 : i1 to i32
    %c0_i32_9 = arith.constant 0 : i32
    %11 = arith.cmpi ne, %10, %c0_i32_9 : i32
    scf.if %11 {
      %c0_10 = arith.constant 0 : index
      %c0_11 = arith.constant 0 : index
      %12 = vector.load %arg6[%c0_10, %c0_11] : memref<128x256xf32, #tpu.memory_space<vmem>>, vector<128x256xf32>
      %c0_12 = arith.constant 0 : index
      %c0_13 = arith.constant 0 : index
      %13 = vector.load %arg5[%c0_12, %c0_13] : memref<1x256xf32, #tpu.memory_space<vmem>>, vector<1x256xf32>
      %14 = vector.broadcast %13 : vector<1x256xf32> to vector<128x256xf32>
      %15 = arith.addf %12, %14 : vector<128x256xf32>
      %cst_14 = arith.constant 0.000000e+00 : f32
      %16 = vector.broadcast %cst_14 : f32 to vector<128x256xf32>
      %17 = arith.maximumf %15, %16 : vector<128x256xf32>
      %c0_15 = arith.constant 0 : index
      %c0_16 = arith.constant 0 : index
      %18 = vector.load %arg6[%c0_15, %c0_16] : memref<128x256xf32, #tpu.memory_space<vmem>>, vector<128x256xf32>
      tpu.vector_store %arg6[%c0_15, %c0_16], %17 {strides = array<i32>} : memref<128x256xf32, #tpu.memory_space<vmem>>, vector<128x256xf32>,
    } else {
    }
    return
  }
  func.func @transform_0(%arg0: i32, %arg1: i32, %arg2: i32) -> (i32, i32) {
    %c0_i32 = arith.constant 0 : i32
    return %arg0, %arg2 : i32, i32
  }
  func.func @transform_1(%arg0: i32, %arg1: i32, %arg2: i32) -> (i32, i32) {
    %c0_i32 = arith.constant 0 : i32
    return %arg2, %arg1 : i32, i32
  }
  func.func @transform_2(%arg0: i32, %arg1: i32, %arg2: i32) -> (i32, i32) {
    %c0_i32 = arith.constant 0 : i32
    %c0_i32_0 = arith.constant 0 : i32
    return %c0_i32, %arg1 : i32, i32
  }
  func.func @transform_3(%arg0: i32, %arg1: i32, %arg2: i32) -> (i32, i32) {
    %c0_i32 = arith.constant 0 : i32
    return %arg0, %arg1 : i32, i32
  }
}

</mosaic_0001>

<llo_original>
// kernel: a_call__.1
$region0: #{a_call__.1}
  #allocation0 [shape = 'u32[]', space=smem, size = 0x4, offset = 0x4, fixed_abs, tag = 'smem constant byte address 0x4 - core index']
  #allocation1 [shape = 'u32[72,128]{1,0:T(1,128)}', space=vmem, size = 0x9000, scoped, tag = 'internal scratch']
  %s0 = inlined_call_operand.vmem [shape: bf16[256,256], index: 0, kind: input, shape index: {}]
  %s1 = inlined_call_operand.vmem [shape: bf16[256,512], index: 1, kind: input, shape index: {}]
  %s2 = inlined_call_operand.vmem [shape: f32[1,512], index: 2, kind: input, shape index: {}]
  %s3 = inlined_call_operand.hbm [shape: f32[256,512], index: 3, kind: output, shape index: {}]
  %s4 = sld [smem:[#allocation0]]
  $region91: #{a_call__.1} parent=0
    _
  %s6 = ssub.s32 1, %s4
  %s7 = scalar_select 0, %s6, %s4
  $region1: #{a_call__.1} parent=0
    #allocation2 [shape = 'u8[262144]{0}', space=vmem, size = 0x40000, scoped, tag = 'input window, operand 1']
    #allocation3 [shape = 'u8[262144]{0}', space=vmem, size = 0x40000, scoped, tag = 'output window, operand 0']
    #allocation4 [shape = 's32[2]{0}', space=sflag, size = 0x8, scoped, tag = 'scoped memory for a_call__.1']
    %8 = vsyncpa [#allocation4], 0
    %s9 = scalar_lea.sflag [#allocation4], 1
    %10 = vsyncpa %s9, 0
    loop: start=0, step=1, limit=6
    $region2: #{a_call__.1} parent=1 // loop_pre_header
      _
    $region3: #{a_call__.1} parent=1 // loop_header
      %s12 = sphi 0, %s16
      %p13 = scmp.ge.s32.totalorder %s12, 6
      %s19 = sphi 0, %s38
      %s20 = sphi 0, %s34
      %s21 = sphi 0, %s30
      %s22 = sphi 0, %s19
      %s23 = sphi 0, %s20
      %s24 = sphi 0, %s21
      %s25 = sphi 0, %s22
      %s26 = sphi 0, %s23
      %s27 = sphi 0, %s24
      %s43 = sphi 0, %s45
      %s46 = sphi 0, %s43
      %s47 = sphi 0, %s46
      %s63 = sphi 0, %s47
      %s71 = sphi 0, %s73
      %s74 = sphi 0, %s71
      %s75 = sphi 0, %s74
      %s91 = sphi 0, %s75
      %s97 = sphi 0, %s99
      %s100 = sphi 0, %s97
      %s101 = sphi 0, %s100
      %s117 = sphi 0, %s101
      %s125 = sphi 0, %s127
      %s128 = sphi 0, %s125
      %s129 = sphi 0, %s128
      %s145 = sphi 0, %s129
    $region4: #{a_call__.1} parent=1 // loop_header_branch
      %15 = sbr.rel (%p13) target = $region8
    $region5: #{a_call__.1} parent=1 // loop_body
      %s17 = ssub.s32 %s12, 1
      %s18 = ssub.s32 %s12, 2
      %s28 = sadd.s32 1, %s21
      %p29 = scmp.ge.s32.totalorder %s28, 1
      %s30 = scalar_select %p29, 0, %s28
      %s31 = sadd.s32 1, %s20
      %s32 = scalar_select %p29, %s31, %s20
      %p33 = scmp.ge.s32.totalorder %s32, 2
      %s34 = scalar_select %p33, 0, %s32
      %s35 = sadd.s32 1, %s19
      %s36 = scalar_select %p33, %s35, %s19
      %p37 = scmp.ge.s32.totalorder %s36, 2
      %s38 = scalar_select %p37, 0, %s36
      %s39 = ssub.s32 %s19, %s38
      %s40 = ssub.s32 %s21, %s30
      %s41 = sor.u32 %s39, %s40
      %p42 = scmp.eq.s32.totalorder %s41, 0
      %s44 = sadd.s32 %s43, 1
      %s45 = scalar_select %p42, %s43, %s44
      %p48 = pneg %p42
      %p49 = scmp.eq.s32.totalorder %s12, 3
      %p50 = por %p48, %p49
      %p51 = scmp.ne.s32.totalorder %s43, %s46
      %p52 = scmp.eq.s32.totalorder %s12, 0
      %p53 = por %p51, %p52
      %p54 = scmp.ne.s32.totalorder %s43, %s46
      %p55 = scmp.eq.s32.totalorder %s17, 3
      %p56 = por %p54, %p55
      %p57 = scmp.ne.s32.totalorder %s46, %s47
      %p58 = scmp.eq.s32.totalorder %s17, 0
      %p59 = por %p57, %p58
      %p60 = scmp.ne.s32.totalorder %s46, %s47
      %p61 = scmp.eq.s32.totalorder %s18, 3
      %p62 = por %p60, %p61
      %p64 = scmp.ne.s32.totalorder %s47, %s63
      %p65 = scmp.eq.s32.totalorder %s18, 0
      %p66 = por %p64, %p65
      %s67 = ssub.s32 %s21, %s30
      %s68 = ssub.s32 %s20, %s34
      %s69 = sor.u32 %s67, %s68
      %p70 = scmp.eq.s32.totalorder %s69, 0
      %s72 = sadd.s32 %s71, 1
      %s73 = scalar_select %p70, %s71, %s72
      %p76 = pneg %p70
      %p77 = scmp.eq.s32.totalorder %s12, 3
      %p78 = por %p76, %p77
      %p79 = scmp.ne.s32.totalorder %s71, %s74
      %p80 = scmp.eq.s32.totalorder %s12, 0
      %p81 = por %p79, %p80
      %p82 = scmp.ne.s32.totalorder %s71, %s74
      %p83 = scmp.eq.s32.totalorder %s17, 3
      %p84 = por %p82, %p83
      %p85 = scmp.ne.s32.totalorder %s74, %s75
      %p86 = scmp.eq.s32.totalorder %s17, 0
      %p87 = por %p85, %p86
      %p88 = scmp.ne.s32.totalorder %s74, %s75
      %p89 = scmp.eq.s32.totalorder %s18, 3
      %p90 = por %p88, %p89
      %p92 = scmp.ne.s32.totalorder %s75, %s91
      %p93 = scmp.eq.s32.totalorder %s18, 0
      %p94 = por %p92, %p93
      %s95 = ssub.s32 %s20, %s34
      %p96 = scmp.eq.s32.totalorder %s95, 0
      %s98 = sadd.s32 %s97, 1
      %s99 = scalar_select %p96, %s97, %s98
      %p102 = pneg %p96
      %p103 = scmp.eq.s32.totalorder %s12, 3
      %p104 = por %p102, %p103
      %p105 = scmp.ne.s32.totalorder %s97, %s100
      %p106 = scmp.eq.s32.totalorder %s12, 0
      %p107 = por %p105, %p106
      %p108 = scmp.ne.s32.totalorder %s97, %s100
      %p109 = scmp.eq.s32.totalorder %s17, 3
      %p110 = por %p108, %p109
      %p111 = scmp.ne.s32.totalorder %s100, %s101
      %p112 = scmp.eq.s32.totalorder %s17, 0
      %p113 = por %p111, %p112
      %p114 = scmp.ne.s32.totalorder %s100, %s101
      %p115 = scmp.eq.s32.totalorder %s18, 3
      %p116 = por %p114, %p115
      %p118 = scmp.ne.s32.totalorder %s101, %s117
      %p119 = scmp.eq.s32.totalorder %s18, 0
      %p120 = por %p118, %p119
      %s121 = ssub.s32 %s19, %s38
      %s122 = ssub.s32 %s20, %s34
      %s123 = sor.u32 %s121, %s122
      %p124 = scmp.eq.s32.totalorder %s123, 0
      %s126 = sadd.s32 %s125, 1
      %s127 = scalar_select %p124, %s125, %s126
      %p130 = pneg %p124
      %p131 = scmp.eq.s32.totalorder %s12, 3
      %p132 = por %p130, %p131
      %p133 = scmp.ne.s32.totalorder %s125, %s128
      %p134 = scmp.eq.s32.totalorder %s12, 0
      %p135 = por %p133, %p134
      %p136 = scmp.ne.s32.totalorder %s125, %s128
      %p137 = scmp.eq.s32.totalorder %s17, 3
      %p138 = por %p136, %p137
      %p139 = scmp.ne.s32.totalorder %s128, %s129
      %p140 = scmp.eq.s32.totalorder %s17, 0
      %p141 = por %p139, %p140
      %p142 = scmp.ne.s32.totalorder %s128, %s129
      %p143 = scmp.eq.s32.totalorder %s18, 3
      %p144 = por %p142, %p143
      %p146 = scmp.ne.s32.totalorder %s129, %s145
      %p147 = scmp.eq.s32.totalorder %s18, 0
      %p148 = por %p146, %p147
      %p149 = scmp.le.s32.totalorder 1, %s12
      %p150 = scmp.lt.s32.totalorder %s12, 5
      %p151 = pnand %p149, %p150
      %p152 = pneg %p151
      // Predicated region
      $region9: #{a_call__.1} parent=5 // pred_check
        _
      $region10: #{a_call__.1} parent=5 // pred_check_branch
        %154 = sbr.rel (%p151) target = $region12
      $region11: #{a_call__.1} parent=5 // pred_region
        %s155 = ssub.s32 %s12, 1
      $region12: #{a_call__.1} parent=5 // pred_fallthru
        _
      %p156 = scmp.lt.s32.totalorder %s12, 4
      // Predicated region
      $region13: #{a_call__.1} parent=5 // pred_check
        %p157 = pneg %p156
      $region14: #{a_call__.1} parent=5 // pred_check_branch
        %159 = sbr.rel (%p157) target = $region16
      $region15: #{a_call__.1} parent=5 // pred_region
        // Predicated region
        $region17: #{a_call__.1} parent=15 // pred_check
          %p160 = pneg %p53
        $region18: #{a_call__.1} parent=15 // pred_check_branch
          %162 = sbr.rel (%p160) target = $region20
        $region19: #{a_call__.1} parent=15 // pred_region
          %s163 = smul.u32 16, %s19
          %s164 = smul.u32 2, %s21
          %p165 = scmp.lt.s32.totalorder %s163, 31
          %s166 = scalar_select %p165, %s163, 31
          %p167 = scmp.lt.s32.totalorder %s164, 1
          %s168 = scalar_select %p167, %s164, 1
          %s169 = smul.addr %s166, 2
          %s170 = sadd.s32 %s168, %s169
          %s171 = smul.addr %s170, 4
          %s172 = scalar_lea.vmem %s0, %s171
          %s173 = smul.u32 16, %s19
          %s174 = smul.u32 2, %s21
        $region20: #{a_call__.1} parent=15 // pred_fallthru
          _
        // Predicated region
        $region21: #{a_call__.1} parent=15 // pred_check
          %p175 = pneg %p81
        $region22: #{a_call__.1} parent=15 // pred_check_branch
          %177 = sbr.rel (%p175) target = $region24
        $region23: #{a_call__.1} parent=15 // pred_region
          %s178 = sand.u32 %s71, 1
          %s179 = sand.u32 %s71, 1
          %s180 = smul.addr %s179, 256
          %s181 = scalar_lea.vmem [#allocation2], %s180
          %s182 = smul.u32 32, %s21
          %s183 = smul.u32 2, %s20
          %s184 = smul.addr %s182, 4
          %s185 = sadd.s32 %s183, %s184
          %s186 = smul.addr %s185, 4
          %s187 = scalar_lea.vmem %s1, %s186
          // Predicated region
          $region25: #{a_call__.1} parent=23 // pred_check
            _
          $region26: #{a_call__.1} parent=23 // pred_check_branch
            %189 = sbr.rel (0) target = $region28
          $region27: #{a_call__.1} parent=23 // pred_region
            // Predicated region
            $region29: #{a_call__.1} parent=27 // pred_check
              _
            $region30: #{a_call__.1} parent=27 // pred_check_branch
              %191 = sbr.rel (0) target = $region32
            $region31: #{a_call__.1} parent=27 // pred_region
              // Predicated region
              $region44: #{a_call__.1} parent=31 // pred_check
                _
              $region45: #{a_call__.1} parent=31 // pred_check_branch
                %269 = sbr.rel (0) target = $region47
              $region46: #{a_call__.1} parent=31 // pred_region
                loop: start=0, step=1, limit=1
                $region48: #{a_call__.1} parent=46 // loop_pre_header
                  _
                $region49: #{a_call__.1} parent=46 // loop_header
                  %s271 = sphi 0, %s275
                  %p272 = scmp.ge.s32.totalorder %s271, 1
                  %s276 = sphi %s187, %s187
                  %s277 = sphi %s181, %s181
                $region50: #{a_call__.1} parent=46 // loop_header_branch
                  %274 = sbr.rel (%p272) target = $region54
                $region51: #{a_call__.1} parent=46 // loop_body
                  %v278 = vld [vmem:[%s276] sm:$0xff]
                  %279 = vst [vmem:[%s277] sm:$0xff] %v278
                  %v280 = vld [vmem:[%s276 + $0x10] sm:$0xff]
                  %281 = vst [vmem:[%s277 + $0x8] sm:$0xff] %v280
                  %v282 = vld [vmem:[%s276 + $0x20] sm:$0xff]
                  %283 = vst [vmem:[%s277 + $0x10] sm:$0xff] %v282
                  %v284 = vld [vmem:[%s276 + $0x30] sm:$0xff]
                  %285 = vst [vmem:[%s277 + $0x18] sm:$0xff] %v284
                  %v286 = vld [vmem:[%s276 + $0x40] sm:$0xff]
                  %287 = vst [vmem:[%s277 + $0x20] sm:$0xff] %v286
                  %v288 = vld [vmem:[%s276 + $0x50] sm:$0xff]
                  %289 = vst [vmem:[%s277 + $0x28] sm:$0xff] %v288
                  %v290 = vld [vmem:[%s276 + $0x60] sm:$0xff]
                  %291 = vst [vmem:[%s277 + $0x30] sm:$0xff] %v290
                  %v292 = vld [vmem:[%s276 + $0x70] sm:$0xff]
                  %293 = vst [vmem:[%s277 + $0x38] sm:$0xff] %v292
                  %v294 = vld [vmem:[%s276 + $0x80] sm:$0xff]
                  %295 = vst [vmem:[%s277 + $0x40] sm:$0xff] %v294
                  %v296 = vld [vmem:[%s276 + $0x90] sm:$0xff]
                  %297 = vst [vmem:[%s277 + $0x48] sm:$0xff] %v296
                  %v298 = vld [vmem:[%s276 + $0xa0] sm:$0xff]
                  %299 = vst [vmem:[%s277 + $0x50] sm:$0xff] %v298
                  %v300 = vld [vmem:[%s276 + $0xb0] sm:$0xff]
                  %301 = vst [vmem:[%s277 + $0x58] sm:$0xff] %v300
                  %v302 = vld [vmem:[%s276 + $0xc0] sm:$0xff]
                  %303 = vst [vmem:[%s277 + $0x60] sm:$0xff] %v302
                  %v304 = vld [vmem:[%s276 + $0xd0] sm:$0xff]
                  %305 = vst [vmem:[%s277 + $0x68] sm:$0xff] %v304
                  %v306 = vld [vmem:[%s276 + $0xe0] sm:$0xff]
                  %307 = vst [vmem:[%s277 + $0x70] sm:$0xff] %v306
                  %v308 = vld [vmem:[%s276 + $0xf0] sm:$0xff]
                  %309 = vst [vmem:[%s277 + $0x78] sm:$0xff] %v308
                  %v310 = vld [vmem:[%s276 + $0x100] sm:$0xff]
                  %311 = vst [vmem:[%s277 + $0x80] sm:$0xff] %v310
                  %v312 = vld [vmem:[%s276 + $0x110] sm:$0xff]
                  %313 = vst [vmem:[%s277 + $0x88] sm:$0xff] %v312
                  %v314 = vld [vmem:[%s276 + $0x120] sm:$0xff]
                  %315 = vst [vmem:[%s277 + $0x90] sm:$0xff] %v314
                  %v316 = vld [vmem:[%s276 + $0x130] sm:$0xff]
                  %317 = vst [vmem:[%s277 + $0x98] sm:$0xff] %v316
                  %v318 = vld [vmem:[%s276 + $0x140] sm:$0xff]
                  %319 = vst [vmem:[%s277 + $0xa0] sm:$0xff] %v318
                  %v320 = vld [vmem:[%s276 + $0x150] sm:$0xff]
                  %321 = vst [vmem:[%s277 + $0xa8] sm:$0xff] %v320
                  %v322 = vld [vmem:[%s276 + $0x160] sm:$0xff]
                  %323 = vst [vmem:[%s277 + $0xb0] sm:$0xff] %v322
                  %v324 = vld [vmem:[%s276 + $0x170] sm:$0xff]
                  %325 = vst [vmem:[%s277 + $0xb8] sm:$0xff] %v324
                  %v326 = vld [vmem:[%s276 + $0x180] sm:$0xff]
                  %327 = vst [vmem:[%s277 + $0xc0] sm:$0xff] %v326
                  %v328 = vld [vmem:[%s276 + $0x190] sm:$0xff]
                  %329 = vst [vmem:[%s277 + $0xc8] sm:$0xff] %v328
                  %v330 = vld [vmem:[%s276 + $0x1a0] sm:$0xff]
                  %331 = vst [vmem:[%s277 + $0xd0] sm:$0xff] %v330
                  %v332 = vld [vmem:[%s276 + $0x1b0] sm:$0xff]
                  %333 = vst [vmem:[%s277 + $0xd8] sm:$0xff] %v332
                  %v334 = vld [vmem:[%s276 + $0x1c0] sm:$0xff]
                  %335 = vst [vmem:[%s277 + $0xe0] sm:$0xff] %v334
                  %v336 = vld [vmem:[%s276 + $0x1d0] sm:$0xff]
                  %337 = vst [vmem:[%s277 + $0xe8] sm:$0xff] %v336
                  %v338 = vld [vmem:[%s276 + $0x1e0] sm:$0xff]
                  %339 = vst [vmem:[%s277 + $0xf0] sm:$0xff] %v338
                  %v340 = vld [vmem:[%s276 + $0x1f0] sm:$0xff]
                  %341 = vst [vmem:[%s277 + $0xf8] sm:$0xff] %v340
                $region52: #{a_call__.1} parent=46 // loop_footer
                  %s275 = sadd.s32 1, %s271
                $region53: #{a_call__.1} parent=46 // loop_footer_branch
                  %270 = sbr.rel target = $region49
                $region54: #{a_call__.1} parent=46 // loop_exit
                  _
              $region47: #{a_call__.1} parent=31 // pred_fallthru
                _
              // Predicated region
              $region55: #{a_call__.1} parent=31 // pred_check
                _
              $region56: #{a_call__.1} parent=31 // pred_check_branch
                %343 = sbr.rel target = $region58
              $region57: #{a_call__.1} parent=31 // pred_region
                _
              $region58: #{a_call__.1} parent=31 // pred_fallthru
                _
            $region32: #{a_call__.1} parent=27 // pred_fallthru
              _
            // Predicated region
            $region33: #{a_call__.1} parent=27 // pred_check
              _
            $region34: #{a_call__.1} parent=27 // pred_check_branch
              %193 = sbr.rel target = $region36
            $region35: #{a_call__.1} parent=27 // pred_region
              %s195 = ssub.s32 256, 1
              loop: start=0, step=1, limit=1
              $region37: #{a_call__.1} parent=35 // loop_pre_header
                _
              $region38: #{a_call__.1} parent=35 // loop_header
                %s197 = sphi 0, %s201
                %p198 = scmp.ge.s32.totalorder %s197, 1
                %s202 = sphi %s187, %s187
                %s203 = sphi %s181, %s181
              $region39: #{a_call__.1} parent=35 // loop_header_branch
                %200 = sbr.rel (%p198) target = $region43
              $region40: #{a_call__.1} parent=35 // loop_body
                %v204 = vld [vmem:[%s202] sm:%s195]
                %205 = vst [vmem:[%s203] sm:%s195] %v204
                %v206 = vld [vmem:[%s202 + $0x10] sm:%s195]
                %207 = vst [vmem:[%s203 + $0x8] sm:%s195] %v206
                %v208 = vld [vmem:[%s202 + $0x20] sm:%s195]
                %209 = vst [vmem:[%s203 + $0x10] sm:%s195] %v208
                %v210 = vld [vmem:[%s202 + $0x30] sm:%s195]
                %211 = vst [vmem:[%s203 + $0x18] sm:%s195] %v210
                %v212 = vld [vmem:[%s202 + $0x40] sm:%s195]
                %213 = vst [vmem:[%s203 + $0x20] sm:%s195] %v212
                %v214 = vld [vmem:[%s202 + $0x50] sm:%s195]
                %215 = vst [vmem:[%s203 + $0x28] sm:%s195] %v214
                %v216 = vld [vmem:[%s202 + $0x60] sm:%s195]
                %217 = vst [vmem:[%s203 + $0x30] sm:%s195] %v216
                %v218 = vld [vmem:[%s202 + $0x70] sm:%s195]
                %219 = vst [vmem:[%s203 + $0x38] sm:%s195] %v218
                %v220 = vld [vmem:[%s202 + $0x80] sm:%s195]
                %221 = vst [vmem:[%s203 + $0x40] sm:%s195] %v220
                %v222 = vld [vmem:[%s202 + $0x90] sm:%s195]
                %223 = vst [vmem:[%s203 + $0x48] sm:%s195] %v222
                %v224 = vld [vmem:[%s202 + $0xa0] sm:%s195]
                %225 = vst [vmem:[%s203 + $0x50] sm:%s195] %v224
                %v226 = vld [vmem:[%s202 + $0xb0] sm:%s195]
                %227 = vst [vmem:[%s203 + $0x58] sm:%s195] %v226
                %v228 = vld [vmem:[%s202 + $0xc0] sm:%s195]
                %229 = vst [vmem:[%s203 + $0x60] sm:%s195] %v228
                %v230 = vld [vmem:[%s202 + $0xd0] sm:%s195]
                %231 = vst [vmem:[%s203 + $0x68] sm:%s195] %v230
                %v232 = vld [vmem:[%s202 + $0xe0] sm:%s195]
                %233 = vst [vmem:[%s203 + $0x70] sm:%s195] %v232
                %v234 = vld [vmem:[%s202 + $0xf0] sm:%s195]
                %235 = vst [vmem:[%s203 + $0x78] sm:%s195] %v234
                %v236 = vld [vmem:[%s202 + $0x100] sm:%s195]
                %237 = vst [vmem:[%s203 + $0x80] sm:%s195] %v236
                %v238 = vld [vmem:[%s202 + $0x110] sm:%s195]
                %239 = vst [vmem:[%s203 + $0x88] sm:%s195] %v238
                %v240 = vld [vmem:[%s202 + $0x120] sm:%s195]
                %241 = vst [vmem:[%s203 + $0x90] sm:%s195] %v240
                %v242 = vld [vmem:[%s202 + $0x130] sm:%s195]
                %243 = vst [vmem:[%s203 + $0x98] sm:%s195] %v242
                %v244 = vld [vmem:[%s202 + $0x140] sm:%s195]
                %245 = vst [vmem:[%s203 + $0xa0] sm:%s195] %v244
                %v246 = vld [vmem:[%s202 + $0x150] sm:%s195]
                %247 = vst [vmem:[%s203 + $0xa8] sm:%s195] %v246
                %v248 = vld [vmem:[%s202 + $0x160] sm:%s195]
                %249 = vst [vmem:[%s203 + $0xb0] sm:%s195] %v248
                %v250 = vld [vmem:[%s202 + $0x170] sm:%s195]
                %251 = vst [vmem:[%s203 + $0xb8] sm:%s195] %v250
                %v252 = vld [vmem:[%s202 + $0x180] sm:%s195]
                %253 = vst [vmem:[%s203 + $0xc0] sm:%s195] %v252
                %v254 = vld [vmem:[%s202 + $0x190] sm:%s195]
                %255 = vst [vmem:[%s203 + $0xc8] sm:%s195] %v254
                %v256 = vld [vmem:[%s202 + $0x1a0] sm:%s195]
                %257 = vst [vmem:[%s203 + $0xd0] sm:%s195] %v256
                %v258 = vld [vmem:[%s202 + $0x1b0] sm:%s195]
                %259 = vst [vmem:[%s203 + $0xd8] sm:%s195] %v258
                %v260 = vld [vmem:[%s202 + $0x1c0] sm:%s195]
                %261 = vst [vmem:[%s203 + $0xe0] sm:%s195] %v260
                %v262 = vld [vmem:[%s202 + $0x1d0] sm:%s195]
                %263 = vst [vmem:[%s203 + $0xe8] sm:%s195] %v262
                %v264 = vld [vmem:[%s202 + $0x1e0] sm:%s195]
                %265 = vst [vmem:[%s203 + $0xf0] sm:%s195] %v264
                %v266 = vld [vmem:[%s202 + $0x1f0] sm:%s195]
                %267 = vst [vmem:[%s203 + $0xf8] sm:%s195] %v266
              $region41: #{a_call__.1} parent=35 // loop_footer
                %s201 = sadd.s32 1, %s197
              $region42: #{a_call__.1} parent=35 // loop_footer_branch
                %196 = sbr.rel target = $region38
              $region43: #{a_call__.1} parent=35 // loop_exit
                _
            $region36: #{a_call__.1} parent=27 // pred_fallthru
              _
          $region28: #{a_call__.1} parent=23 // pred_fallthru
            _
          %344 = vnop
        $region24: #{a_call__.1} parent=15 // pred_fallthru
          _
        // Predicated region
        $region59: #{a_call__.1} parent=15 // pred_check
          %p345 = pneg %p107
        $region60: #{a_call__.1} parent=15 // pred_check_branch
          %347 = sbr.rel (%p345) target = $region62
        $region61: #{a_call__.1} parent=15 // pred_region
          %s348 = smul.u32 2, %s20
          %p349 = scmp.lt.s32.totalorder %s348, 3
          %s350 = scalar_select %p349, %s348, 3
          %s351 = scalar_lea.vmem %s2, %s350
          %s352 = smul.u32 2, %s20
        $region62: #{a_call__.1} parent=15 // pred_fallthru
          _
      $region16: #{a_call__.1} parent=5 // pred_fallthru
        _
      %p353 = scmp.le.s32.totalorder 1, %s12
      %p354 = scmp.lt.s32.totalorder %s12, 5
      %p355 = pnand %p353, %p354
      %p356 = pneg %p355
      // Predicated region
      $region63: #{a_call__.1} parent=5 // pred_check
        _
      $region64: #{a_call__.1} parent=5 // pred_check_branch
        %358 = sbr.rel (%p355) target = $region66
      $region65: #{a_call__.1} parent=5 // pred_region
        %s359 = ssub.s32 %s12, 1
        %s360 = sand.u32 %s74, 1
        %s361 = sand.u32 %s74, 1
        %s362 = smul.addr %s361, 256
        %s363 = scalar_lea.vmem [#allocation2], %s362
        // Predicated region
        $region67: #{a_call__.1} parent=65 // pred_check
          %p364 = pneg %p87
        $region68: #{a_call__.1} parent=65 // pred_check_branch
          %366 = sbr.rel (%p364) target = $region70
        $region69: #{a_call__.1} parent=65 // pred_region
          _
        $region70: #{a_call__.1} parent=65 // pred_fallthru
          _
        %s367 = smul.u32 16, %s22
        %s368 = smul.u32 2, %s24
        %p369 = scmp.lt.s32.totalorder %s367, 31
        %s370 = scalar_select %p369, %s367, 31
        %p371 = scmp.lt.s32.totalorder %s368, 1
        %s372 = scalar_select %p371, %s368, 1
        %s373 = smul.addr %s370, 2
        %s374 = sadd.s32 %s372, %s373
        %s375 = smul.addr %s374, 4
        %s376 = scalar_lea.vmem %s0, %s375
        %p377 = pneg %p59
        %p378 = pneg %p56
        %s379 = sand.u32 %s74, 1
        %s380 = sand.u32 %s74, 1
        %s381 = smul.addr %s380, 256
        %s382 = scalar_lea.vmem [#allocation2], %s381
        %p383 = pneg %p87
        %p384 = pneg %p84
        %s385 = smul.u32 2, %s23
        %p386 = scmp.lt.s32.totalorder %s385, 3
        %s387 = scalar_select %p386, %s385, 3
        %s388 = scalar_lea.vmem %s2, %s387
        %p389 = pneg %p113
        %p390 = pneg %p110
        %p391 = pneg %p141
        %p392 = pneg %p138
        %s393 = sand.u32 %s128, 1
        %s394 = scalar_lea.sflag [#allocation4], %s393
        %s395 = sand.u32 %s128, 1
        %s396 = smul.addr %s395, 256
        %s397 = scalar_lea.vmem [#allocation3], %s396
        %s398 = smul.u32 16, %s22
        %s399 = smul.u32 2, %s24
        %p400 = scmp.lt.s32.totalorder %s398, 31
        %s401 = scalar_select %p400, %s398, 31
        %p402 = scmp.lt.s32.totalorder %s399, 1
        %s403 = scalar_select %p402, %s399, 1
        %s404 = smul.addr %s401, 2
        %s405 = sadd.s32 %s403, %s404
        %s406 = smul.addr %s405, 4
        %s407 = scalar_lea.vmem %s0, %s406
        %s408 = smul.u32 16, %s22
        %s409 = smul.u32 2, %s24
        %s410 = smul.u32 32, %s24
        %s411 = smul.u32 2, %s23
        %s412 = smul.u32 2, %s23
        %p413 = scmp.lt.s32.totalorder %s412, 3
        %s414 = scalar_select %p413, %s412, 3
        %s415 = scalar_lea.vmem %s2, %s414
        %s416 = smul.u32 2, %s23
        %s417 = smul.u32 16, %s22
        %s418 = smul.u32 2, %s23
        %p419 = scmp.eq.s32.totalorder %s24, 0
        // Predicated region
        $region71: #{a_call__.1} parent=65 // pred_check
          %p420 = pneg %p419
        $region72: #{a_call__.1} parent=65 // pred_check_branch
          %422 = sbr.rel (%p420) target = $region74
        $region73: #{a_call__.1} parent=65 // pred_region
          %423 = vst [vmem:[%s397] sm:$0xff] 0.0
          %424 = vst [vmem:[%s397 + $0x8] sm:$0xff] 0.0
          %425 = vst [vmem:[%s397 + $0x10] sm:$0xff] 0.0
          %426 = vst [vmem:[%s397 + $0x18] sm:$0xff] 0.0
          %427 = vst [vmem:[%s397 + $0x20] sm:$0xff] 0.0
          %428 = vst [vmem:[%s397 + $0x28] sm:$0xff] 0.0
          %429 = vst [vmem:[%s397 + $0x30] sm:$0xff] 0.0
          %430 = vst [vmem:[%s397 + $0x38] sm:$0xff] 0.0
          %431 = vst [vmem:[%s397 + $0x40] sm:$0xff] 0.0
          %432 = vst [vmem:[%s397 + $0x48] sm:$0xff] 0.0
          %433 = vst [vmem:[%s397 + $0x50] sm:$0xff] 0.0
          %434 = vst [vmem:[%s397 + $0x58] sm:$0xff] 0.0
          %435 = vst [vmem:[%s397 + $0x60] sm:$0xff] 0.0
          %436 = vst [vmem:[%s397 + $0x68] sm:$0xff] 0.0
          %437 = vst [vmem:[%s397 + $0x70] sm:$0xff] 0.0
          %438 = vst [vmem:[%s397 + $0x78] sm:$0xff] 0.0
          %439 = vst [vmem:[%s397 + $0x80] sm:$0xff] 0.0
          %440 = vst [vmem:[%s397 + $0x88] sm:$0xff] 0.0
          %441 = vst [vmem:[%s397 + $0x90] sm:$0xff] 0.0
          %442 = vst [vmem:[%s397 + $0x98] sm:$0xff] 0.0
          %443 = vst [vmem:[%s397 + $0xa0] sm:$0xff] 0.0
          %444 = vst [vmem:[%s397 + $0xa8] sm:$0xff] 0.0
          %445 = vst [vmem:[%s397 + $0xb0] sm:$0xff] 0.0
          %446 = vst [vmem:[%s397 + $0xb8] sm:$0xff] 0.0
          %447 = vst [vmem:[%s397 + $0xc0] sm:$0xff] 0.0
          %448 = vst [vmem:[%s397 + $0xc8] sm:$0xff] 0.0
          %449 = vst [vmem:[%s397 + $0xd0] sm:$0xff] 0.0
          %450 = vst [vmem:[%s397 + $0xd8] sm:$0xff] 0.0
          %451 = vst [vmem:[%s397 + $0xe0] sm:$0xff] 0.0
          %452 = vst [vmem:[%s397 + $0xe8] sm:$0xff] 0.0
          %453 = vst [vmem:[%s397 + $0xf0] sm:$0xff] 0.0
          %454 = vst [vmem:[%s397 + $0xf8] sm:$0xff] 0.0
        $region74: #{a_call__.1} parent=65 // pred_fallthru
          _
        %v455 = vld [vmem:[%s397] sm:$0xff]
        %v456 = vld [vmem:[%s397 + $0x8] sm:$0xff]
        %v457 = vld [vmem:[%s397 + $0x10] sm:$0xff]
        %v458 = vld [vmem:[%s397 + $0x18] sm:$0xff]
        %v459 = vld [vmem:[%s397 + $0x20] sm:$0xff]
        %v460 = vld [vmem:[%s397 + $0x28] sm:$0xff]
        %v461 = vld [vmem:[%s397 + $0x30] sm:$0xff]
        %v462 = vld [vmem:[%s397 + $0x38] sm:$0xff]
        %v463 = vld [vmem:[%s397 + $0x40] sm:$0xff]
        %v464 = vld [vmem:[%s397 + $0x48] sm:$0xff]
        %v465 = vld [vmem:[%s397 + $0x50] sm:$0xff]
        %v466 = vld [vmem:[%s397 + $0x58] sm:$0xff]
        %v467 = vld [vmem:[%s397 + $0x60] sm:$0xff]
        %v468 = vld [vmem:[%s397 + $0x68] sm:$0xff]
        %v469 = vld [vmem:[%s397 + $0x70] sm:$0xff]
        %v470 = vld [vmem:[%s397 + $0x78] sm:$0xff]
        %v471 = vld [vmem:[%s397 + $0x80] sm:$0xff]
        %v472 = vld [vmem:[%s397 + $0x88] sm:$0xff]
        %v473 = vld [vmem:[%s397 + $0x90] sm:$0xff]
        %v474 = vld [vmem:[%s397 + $0x98] sm:$0xff]
        %v475 = vld [vmem:[%s397 + $0xa0] sm:$0xff]
        %v476 = vld [vmem:[%s397 + $0xa8] sm:$0xff]
        %v477 = vld [vmem:[%s397 + $0xb0] sm:$0xff]
        %v478 = vld [vmem:[%s397 + $0xb8] sm:$0xff]
        %v479 = vld [vmem:[%s397 + $0xc0] sm:$0xff]
        %v480 = vld [vmem:[%s397 + $0xc8] sm:$0xff]
        %v481 = vld [vmem:[%s397 + $0xd0] sm:$0xff]
        %v482 = vld [vmem:[%s397 + $0xd8] sm:$0xff]
        %v483 = vld [vmem:[%s397 + $0xe0] sm:$0xff]
        %v484 = vld [vmem:[%s397 + $0xe8] sm:$0xff]
        %v485 = vld [vmem:[%s397 + $0xf0] sm:$0xff]
        %v486 = vld [vmem:[%s397 + $0xf8] sm:$0xff]
        %v487 = vld [vmem:[%s407] sm:$0xff]
        %v488 = vld [vmem:[%s407 + $0x8] sm:$0xff]
        %v489 = vld [vmem:[%s407 + $0x10] sm:$0xff]
        %v490 = vld [vmem:[%s407 + $0x18] sm:$0xff]
        %v491 = vld [vmem:[%s407 + $0x20] sm:$0xff]
        %v492 = vld [vmem:[%s407 + $0x28] sm:$0xff]
        %v493 = vld [vmem:[%s407 + $0x30] sm:$0xff]
        %v494 = vld [vmem:[%s407 + $0x38] sm:$0xff]
        %v495 = vld [vmem:[%s407 + $0x40] sm:$0xff]
        %v496 = vld [vmem:[%s407 + $0x48] sm:$0xff]
        %v497 = vld [vmem:[%s407 + $0x50] sm:$0xff]
        %v498 = vld [vmem:[%s407 + $0x58] sm:$0xff]
        %v499 = vld [vmem:[%s407 + $0x60] sm:$0xff]
        %v500 = vld [vmem:[%s407 + $0x68] sm:$0xff]
        %v501 = vld [vmem:[%s407 + $0x70] sm:$0xff]
        %v502 = vld [vmem:[%s407 + $0x78] sm:$0xff]
        %v503 = vld [vmem:[%s363] sm:$0xff]
        %v504 = vld [vmem:[%s363 + $0x8] sm:$0xff]
        %v505 = vld [vmem:[%s363 + $0x10] sm:$0xff]
        %v506 = vld [vmem:[%s363 + $0x18] sm:$0xff]
        %v507 = vld [vmem:[%s363 + $0x20] sm:$0xff]
        %v508 = vld [vmem:[%s363 + $0x28] sm:$0xff]
        %v509 = vld [vmem:[%s363 + $0x30] sm:$0xff]
        %v510 = vld [vmem:[%s363 + $0x38] sm:$0xff]
        %v511 = vld [vmem:[%s363 + $0x40] sm:$0xff]
        %v512 = vld [vmem:[%s363 + $0x48] sm:$0xff]
        %v513 = vld [vmem:[%s363 + $0x50] sm:$0xff]
        %v514 = vld [vmem:[%s363 + $0x58] sm:$0xff]
        %v515 = vld [vmem:[%s363 + $0x60] sm:$0xff]
        %v516 = vld [vmem:[%s363 + $0x68] sm:$0xff]
        %v517 = vld [vmem:[%s363 + $0x70] sm:$0xff]
        %v518 = vld [vmem:[%s363 + $0x78] sm:$0xff]
        %v519 = vld [vmem:[%s363 + $0x80] sm:$0xff]
        %v520 = vld [vmem:[%s363 + $0x88] sm:$0xff]
        %v521 = vld [vmem:[%s363 + $0x90] sm:$0xff]
        %v522 = vld [vmem:[%s363 + $0x98] sm:$0xff]
        %v523 = vld [vmem:[%s363 + $0xa0] sm:$0xff]
        %v524 = vld [vmem:[%s363 + $0xa8] sm:$0xff]
        %v525 = vld [vmem:[%s363 + $0xb0] sm:$0xff]
        %v526 = vld [vmem:[%s363 + $0xb8] sm:$0xff]
        %v527 = vld [vmem:[%s363 + $0xc0] sm:$0xff]
        %v528 = vld [vmem:[%s363 + $0xc8] sm:$0xff]
        %v529 = vld [vmem:[%s363 + $0xd0] sm:$0xff]
        %v530 = vld [vmem:[%s363 + $0xd8] sm:$0xff]
        %v531 = vld [vmem:[%s363 + $0xe0] sm:$0xff]
        %v532 = vld [vmem:[%s363 + $0xe8] sm:$0xff]
        %v533 = vld [vmem:[%s363 + $0xf0] sm:$0xff]
        %v534 = vld [vmem:[%s363 + $0xf8] sm:$0xff]
        %v551 = vunpack.c.l.b16 %v487
        %v552 = vunpack.c.h.b16 %v487
        %v553 = vunpack.c.l.b16 %v488
        %v554 = vunpack.c.h.b16 %v488
        %v555 = vunpack.c.l.b16 %v489
        %v556 = vunpack.c.h.b16 %v489
        %v557 = vunpack.c.l.b16 %v490
        %v558 = vunpack.c.h.b16 %v490
        %v559 = vunpack.c.l.b16 %v491
        %v560 = vunpack.c.h.b16 %v491
        %v561 = vunpack.c.l.b16 %v492
        %v562 = vunpack.c.h.b16 %v492
        %v563 = vunpack.c.l.b16 %v493
        %v564 = vunpack.c.h.b16 %v493
        %v565 = vunpack.c.l.b16 %v494
        %v566 = vunpack.c.h.b16 %v494
        %v567 = vunpack.c.l.b16 %v495
        %v568 = vunpack.c.h.b16 %v495
        %v569 = vunpack.c.l.b16 %v496
        %v570 = vunpack.c.h.b16 %v496
        %v571 = vunpack.c.l.b16 %v497
        %v572 = vunpack.c.h.b16 %v497
        %v573 = vunpack.c.l.b16 %v498
        %v574 = vunpack.c.h.b16 %v498
        %v575 = vunpack.c.l.b16 %v499
        %v576 = vunpack.c.h.b16 %v499
        %v577 = vunpack.c.l.b16 %v500
        %v578 = vunpack.c.h.b16 %v500
        %v579 = vunpack.c.l.b16 %v501
        %v580 = vunpack.c.h.b16 %v501
        %v581 = vunpack.c.l.b16 %v502
        %v582 = vunpack.c.h.b16 %v502
        %v583 = vpack.c.b16 %v553, %v551
        %v584 = vpack.c.b16 %v554, %v552
        %v585 = vpack.c.b16 %v557, %v555
        %v586 = vpack.c.b16 %v558, %v556
        %v587 = vpack.c.b16 %v561, %v559
        %v588 = vpack.c.b16 %v562, %v560
        %v589 = vpack.c.b16 %v565, %v563
        %v590 = vpack.c.b16 %v566, %v564
        %v591 = vpack.c.b16 %v569, %v567
        %v592 = vpack.c.b16 %v570, %v568
        %v593 = vpack.c.b16 %v573, %v571
        %v594 = vpack.c.b16 %v574, %v572
        %v595 = vpack.c.b16 %v577, %v575
        %v596 = vpack.c.b16 %v578, %v576
        %v597 = vpack.c.b16 %v581, %v579
        %v598 = vpack.c.b16 %v582, %v580
        %v647 = vunpack.c.l.b16 %v503
        %v648 = vunpack.c.h.b16 %v503
        %v649 = vunpack.c.l.b16 %v504
        %v650 = vunpack.c.h.b16 %v504
        %v651 = vunpack.c.l.b16 %v505
        %v652 = vunpack.c.h.b16 %v505
        %v653 = vunpack.c.l.b16 %v506
        %v654 = vunpack.c.h.b16 %v506
        %v655 = vunpack.c.l.b16 %v507
        %v656 = vunpack.c.h.b16 %v507
        %v657 = vunpack.c.l.b16 %v508
        %v658 = vunpack.c.h.b16 %v508
        %v659 = vunpack.c.l.b16 %v509
        %v660 = vunpack.c.h.b16 %v509
        %v661 = vunpack.c.l.b16 %v510
        %v662 = vunpack.c.h.b16 %v510
        %v663 = vunpack.c.l.b16 %v511
        %v664 = vunpack.c.h.b16 %v511
        %v665 = vunpack.c.l.b16 %v512
        %v666 = vunpack.c.h.b16 %v512
        %v667 = vunpack.c.l.b16 %v513
        %v668 = vunpack.c.h.b16 %v513
        %v669 = vunpack.c.l.b16 %v514
        %v670 = vunpack.c.h.b16 %v514
        %v671 = vunpack.c.l.b16 %v515
        %v672 = vunpack.c.h.b16 %v515
        %v673 = vunpack.c.l.b16 %v516
        %v674 = vunpack.c.h.b16 %v516
        %v675 = vunpack.c.l.b16 %v517
        %v676 = vunpack.c.h.b16 %v517
        %v677 = vunpack.c.l.b16 %v518
        %v678 = vunpack.c.h.b16 %v518
        %v679 = vunpack.c.l.b16 %v519
        %v680 = vunpack.c.h.b16 %v519
        %v681 = vunpack.c.l.b16 %v520
        %v682 = vunpack.c.h.b16 %v520
        %v683 = vunpack.c.l.b16 %v521
        %v684 = vunpack.c.h.b16 %v521
        %v685 = vunpack.c.l.b16 %v522
        %v686 = vunpack.c.h.b16 %v522
        %v687 = vunpack.c.l.b16 %v523
        %v688 = vunpack.c.h.b16 %v523
        %v689 = vunpack.c.l.b16 %v524
        %v690 = vunpack.c.h.b16 %v524
        %v691 = vunpack.c.l.b16 %v525
        %v692 = vunpack.c.h.b16 %v525
        %v693 = vunpack.c.l.b16 %v526
        %v694 = vunpack.c.h.b16 %v526
        %v695 = vunpack.c.l.b16 %v527
        %v696 = vunpack.c.h.b16 %v527
        %v697 = vunpack.c.l.b16 %v528
        %v698 = vunpack.c.h.b16 %v528
        %v699 = vunpack.c.l.b16 %v529
        %v700 = vunpack.c.h.b16 %v529
        %v701 = vunpack.c.l.b16 %v530
        %v702 = vunpack.c.h.b16 %v530
        %v703 = vunpack.c.l.b16 %v531
        %v704 = vunpack.c.h.b16 %v531
        %v705 = vunpack.c.l.b16 %v532
        %v706 = vunpack.c.h.b16 %v532
        %v707 = vunpack.c.l.b16 %v533
        %v708 = vunpack.c.h.b16 %v533
        %v709 = vunpack.c.l.b16 %v534
        %v710 = vunpack.c.h.b16 %v534
        %v711 = vpack.c.b16 %v649, %v647
        %v712 = vpack.c.b16 %v650, %v648
        %v713 = vpack.c.b16 %v653, %v651
        %v714 = vpack.c.b16 %v654, %v652
        %v715 = vpack.c.b16 %v657, %v655
        %v716 = vpack.c.b16 %v658, %v656
        %v717 = vpack.c.b16 %v661, %v659
        %v718 = vpack.c.b16 %v662, %v660
        %v719 = vpack.c.b16 %v665, %v663
        %v720 = vpack.c.b16 %v666, %v664
        %v721 = vpack.c.b16 %v669, %v667
        %v722 = vpack.c.b16 %v670, %v668
        %v723 = vpack.c.b16 %v673, %v671
        %v724 = vpack.c.b16 %v674, %v672
        %v725 = vpack.c.b16 %v677, %v675
        %v726 = vpack.c.b16 %v678, %v676
        %v727 = vpack.c.b16 %v681, %v679
        %v728 = vpack.c.b16 %v682, %v680
        %v729 = vpack.c.b16 %v685, %v683
        %v730 = vpack.c.b16 %v686, %v684
        %v731 = vpack.c.b16 %v689, %v687
        %v732 = vpack.c.b16 %v690, %v688
        %v733 = vpack.c.b16 %v693, %v691
        %v734 = vpack.c.b16 %v694, %v692
        %v735 = vpack.c.b16 %v697, %v695
        %v736 = vpack.c.b16 %v698, %v696
        %v737 = vpack.c.b16 %v701, %v699
        %v738 = vpack.c.b16 %v702, %v700
        %v739 = vpack.c.b16 %v705, %v703
        %v740 = vpack.c.b16 %v706, %v704
        %v741 = vpack.c.b16 %v709, %v707
        %v742 = vpack.c.b16 %v710, %v708
        %775 = vmatpush.bf16.msra.mxu0 %v725
        %776 = vmatpush.bf16.msra.mxu0 %v723
        %777 = vmatpush.bf16.msra.mxu0 %v721
        %778 = vmatpush.bf16.msra.mxu0 %v719
        %779 = vmatpush.bf16.msra.mxu0 %v717
        %780 = vmatpush.bf16.msra.mxu0 %v715
        %781 = vmatpush.bf16.msra.mxu0 %v713
        %782 = vmatpush.bf16.msra.mxu0 %v711
        %783 = vmatmul.bf16.gmra.mxu0 %v583
        %v784 = vpop.f32.mrf.mxu0
        %v785 = vadd.f32 0.0, %v784
        %v786 = vpop.f32.mrf.mxu0
        %v787 = vadd.f32 0.0, %v786
        %788 = vmatmul.bf16.gmra.mxu0 %v585
        %v789 = vpop.f32.mrf.mxu0
        %v790 = vadd.f32 0.0, %v789
        %v791 = vpop.f32.mrf.mxu0
        %v792 = vadd.f32 0.0, %v791
        %793 = vmatmul.bf16.gmra.mxu0 %v587
        %v794 = vpop.f32.mrf.mxu0
        %v795 = vadd.f32 0.0, %v794
        %v796 = vpop.f32.mrf.mxu0
        %v797 = vadd.f32 0.0, %v796
        %798 = vmatmul.bf16.gmra.mxu0 %v589
        %v799 = vpop.f32.mrf.mxu0
        %v800 = vadd.f32 0.0, %v799
        %v801 = vpop.f32.mrf.mxu0
        %v802 = vadd.f32 0.0, %v801
        %803 = vmatmul.bf16.gmra.mxu0 %v591
        %v804 = vpop.f32.mrf.mxu0
        %v805 = vadd.f32 0.0, %v804
        %v806 = vpop.f32.mrf.mxu0
        %v807 = vadd.f32 0.0, %v806
        %808 = vmatmul.bf16.gmra.mxu0 %v593
        %v809 = vpop.f32.mrf.mxu0
        %v810 = vadd.f32 0.0, %v809
        %v811 = vpop.f32.mrf.mxu0
        %v812 = vadd.f32 0.0, %v811
        %813 = vmatmul.bf16.gmra.mxu0 %v595
        %v814 = vpop.f32.mrf.mxu0
        %v815 = vadd.f32 0.0, %v814
        %v816 = vpop.f32.mrf.mxu0
        %v817 = vadd.f32 0.0, %v816
        %818 = vmatmul.bf16.gmra.mxu0 %v597
        %v819 = vpop.f32.mrf.mxu0
        %v820 = vadd.f32 0.0, %v819
        %v821 = vpop.f32.mrf.mxu0
        %v822 = vadd.f32 0.0, %v821
        %823 = vdwg.mxu0
        %824 = vmatpush.bf16.msra.mxu0 %v741
        %825 = vmatpush.bf16.msra.mxu0 %v739
        %826 = vmatpush.bf16.msra.mxu0 %v737
        %827 = vmatpush.bf16.msra.mxu0 %v735
        %828 = vmatpush.bf16.msra.mxu0 %v733
        %829 = vmatpush.bf16.msra.mxu0 %v731
        %830 = vmatpush.bf16.msra.mxu0 %v729
        %831 = vmatpush.bf16.msra.mxu0 %v727
        %832 = vmatmul.bf16.gmra.mxu0 %v584
        %v833 = vpop.f32.mrf.mxu0
        %v834 = vadd.f32 %v785, %v833
        %v835 = vpop.f32.mrf.mxu0
        %v836 = vadd.f32 %v787, %v835
        %837 = vmatmul.bf16.gmra.mxu0 %v586
        %v838 = vpop.f32.mrf.mxu0
        %v839 = vadd.f32 %v790, %v838
        %v840 = vpop.f32.mrf.mxu0
        %v841 = vadd.f32 %v792, %v840
        %842 = vmatmul.bf16.gmra.mxu0 %v588
        %v843 = vpop.f32.mrf.mxu0
        %v844 = vadd.f32 %v795, %v843
        %v845 = vpop.f32.mrf.mxu0
        %v846 = vadd.f32 %v797, %v845
        %847 = vmatmul.bf16.gmra.mxu0 %v590
        %v848 = vpop.f32.mrf.mxu0
        %v849 = vadd.f32 %v800, %v848
        %v850 = vpop.f32.mrf.mxu0
        %v851 = vadd.f32 %v802, %v850
        %852 = vmatmul.bf16.gmra.mxu0 %v592
        %v853 = vpop.f32.mrf.mxu0
        %v854 = vadd.f32 %v805, %v853
        %v855 = vpop.f32.mrf.mxu0
        %v856 = vadd.f32 %v807, %v855
        %857 = vmatmul.bf16.gmra.mxu0 %v594
        %v858 = vpop.f32.mrf.mxu0
        %v859 = vadd.f32 %v810, %v858
        %v860 = vpop.f32.mrf.mxu0
        %v861 = vadd.f32 %v812, %v860
        %862 = vmatmul.bf16.gmra.mxu0 %v596
        %v863 = vpop.f32.mrf.mxu0
        %v864 = vadd.f32 %v815, %v863
        %v865 = vpop.f32.mrf.mxu0
        %v866 = vadd.f32 %v817, %v865
        %867 = vmatmul.bf16.gmra.mxu0 %v598
        %v868 = vpop.f32.mrf.mxu0
        %v869 = vadd.f32 %v820, %v868
        %v870 = vpop.f32.mrf.mxu0
        %v871 = vadd.f32 %v822, %v870
        %872 = vdwg.mxu0
        %873 = vmatpush.bf16.msra.mxu0 %v726
        %874 = vmatpush.bf16.msra.mxu0 %v724
        %875 = vmatpush.bf16.msra.mxu0 %v722
        %876 = vmatpush.bf16.msra.mxu0 %v720
        %877 = vmatpush.bf16.msra.mxu0 %v718
        %878 = vmatpush.bf16.msra.mxu0 %v716
        %879 = vmatpush.bf16.msra.mxu0 %v714
        %880 = vmatpush.bf16.msra.mxu0 %v712
        %881 = vmatmul.bf16.gmra.mxu0 %v583
        %v882 = vpop.f32.mrf.mxu0
        %v883 = vadd.f32 0.0, %v882
        %v884 = vpop.f32.mrf.mxu0
        %v885 = vadd.f32 0.0, %v884
        %886 = vmatmul.bf16.gmra.mxu0 %v585
        %v887 = vpop.f32.mrf.mxu0
        %v888 = vadd.f32 0.0, %v887
        %v889 = vpop.f32.mrf.mxu0
        %v890 = vadd.f32 0.0, %v889
        %891 = vmatmul.bf16.gmra.mxu0 %v587
        %v892 = vpop.f32.mrf.mxu0
        %v893 = vadd.f32 0.0, %v892
        %v894 = vpop.f32.mrf.mxu0
        %v895 = vadd.f32 0.0, %v894
        %896 = vmatmul.bf16.gmra.mxu0 %v589
        %v897 = vpop.f32.mrf.mxu0
        %v898 = vadd.f32 0.0, %v897
        %v899 = vpop.f32.mrf.mxu0
        %v900 = vadd.f32 0.0, %v899
        %901 = vmatmul.bf16.gmra.mxu0 %v591
        %v902 = vpop.f32.mrf.mxu0
        %v903 = vadd.f32 0.0, %v902
        %v904 = vpop.f32.mrf.mxu0
        %v905 = vadd.f32 0.0, %v904
        %906 = vmatmul.bf16.gmra.mxu0 %v593
        %v907 = vpop.f32.mrf.mxu0
        %v908 = vadd.f32 0.0, %v907
        %v909 = vpop.f32.mrf.mxu0
        %v910 = vadd.f32 0.0, %v909
        %911 = vmatmul.bf16.gmra.mxu0 %v595
        %v912 = vpop.f32.mrf.mxu0
        %v913 = vadd.f32 0.0, %v912
        %v914 = vpop.f32.mrf.mxu0
        %v915 = vadd.f32 0.0, %v914
        %916 = vmatmul.bf16.gmra.mxu0 %v597
        %v917 = vpop.f32.mrf.mxu0
        %v918 = vadd.f32 0.0, %v917
        %v919 = vpop.f32.mrf.mxu0
        %v920 = vadd.f32 0.0, %v919
        %921 = vdwg.mxu0
        %922 = vmatpush.bf16.msra.mxu0 %v742
        %923 = vmatpush.bf16.msra.mxu0 %v740
        %924 = vmatpush.bf16.msra.mxu0 %v738
        %925 = vmatpush.bf16.msra.mxu0 %v736
        %926 = vmatpush.bf16.msra.mxu0 %v734
        %927 = vmatpush.bf16.msra.mxu0 %v732
        %928 = vmatpush.bf16.msra.mxu0 %v730
        %929 = vmatpush.bf16.msra.mxu0 %v728
        %930 = vmatmul.bf16.gmra.mxu0 %v584
        %v931 = vpop.f32.mrf.mxu0
        %v932 = vadd.f32 %v883, %v931
        %v933 = vpop.f32.mrf.mxu0
        %v934 = vadd.f32 %v885, %v933
        %935 = vmatmul.bf16.gmra.mxu0 %v586
        %v936 = vpop.f32.mrf.mxu0
        %v937 = vadd.f32 %v888, %v936
        %v938 = vpop.f32.mrf.mxu0
        %v939 = vadd.f32 %v890, %v938
        %940 = vmatmul.bf16.gmra.mxu0 %v588
        %v941 = vpop.f32.mrf.mxu0
        %v942 = vadd.f32 %v893, %v941
        %v943 = vpop.f32.mrf.mxu0
        %v944 = vadd.f32 %v895, %v943
        %945 = vmatmul.bf16.gmra.mxu0 %v590
        %v946 = vpop.f32.mrf.mxu0
        %v947 = vadd.f32 %v898, %v946
        %v948 = vpop.f32.mrf.mxu0
        %v949 = vadd.f32 %v900, %v948
        %950 = vmatmul.bf16.gmra.mxu0 %v592
        %v951 = vpop.f32.mrf.mxu0
        %v952 = vadd.f32 %v903, %v951
        %v953 = vpop.f32.mrf.mxu0
        %v954 = vadd.f32 %v905, %v953
        %955 = vmatmul.bf16.gmra.mxu0 %v594
        %v956 = vpop.f32.mrf.mxu0
        %v957 = vadd.f32 %v908, %v956
        %v958 = vpop.f32.mrf.mxu0
        %v959 = vadd.f32 %v910, %v958
        %960 = vmatmul.bf16.gmra.mxu0 %v596
        %v961 = vpop.f32.mrf.mxu0
        %v962 = vadd.f32 %v913, %v961
        %v963 = vpop.f32.mrf.mxu0
        %v964 = vadd.f32 %v915, %v963
        %965 = vmatmul.bf16.gmra.mxu0 %v598
        %v966 = vpop.f32.mrf.mxu0
        %v967 = vadd.f32 %v918, %v966
        %v968 = vpop.f32.mrf.mxu0
        %v969 = vadd.f32 %v920, %v968
        %970 = vdwg.mxu0
        %v971 = vadd.f32 %v455, %v834
        %v972 = vadd.f32 %v456, %v932
        %v973 = vadd.f32 %v457, %v836
        %v974 = vadd.f32 %v458, %v934
        %v975 = vadd.f32 %v459, %v839
        %v976 = vadd.f32 %v460, %v937
        %v977 = vadd.f32 %v461, %v841
        %v978 = vadd.f32 %v462, %v939
        %v979 = vadd.f32 %v463, %v844
        %v980 = vadd.f32 %v464, %v942
        %v981 = vadd.f32 %v465, %v846
        %v982 = vadd.f32 %v466, %v944
        %v983 = vadd.f32 %v467, %v849
        %v984 = vadd.f32 %v468, %v947
        %v985 = vadd.f32 %v469, %v851
        %v986 = vadd.f32 %v470, %v949
        %v987 = vadd.f32 %v471, %v854
        %v988 = vadd.f32 %v472, %v952
        %v989 = vadd.f32 %v473, %v856
        %v990 = vadd.f32 %v474, %v954
        %v991 = vadd.f32 %v475, %v859
        %v992 = vadd.f32 %v476, %v957
        %v993 = vadd.f32 %v477, %v861
        %v994 = vadd.f32 %v478, %v959
        %v995 = vadd.f32 %v479, %v864
        %v996 = vadd.f32 %v480, %v962
        %v997 = vadd.f32 %v481, %v866
        %v998 = vadd.f32 %v482, %v964
        %v999 = vadd.f32 %v483, %v869
        %v1000 = vadd.f32 %v484, %v967
        %v1001 = vadd.f32 %v485, %v871
        %v1002 = vadd.f32 %v486, %v969
        %1003 = vst [vmem:[%s397] sm:$0xff] %v971
        %1004 = vst [vmem:[%s397 + $0x8] sm:$0xff] %v972
        %1005 = vst [vmem:[%s397 + $0x10] sm:$0xff] %v973
        %1006 = vst [vmem:[%s397 + $0x18] sm:$0xff] %v974
        %1007 = vst [vmem:[%s397 + $0x20] sm:$0xff] %v975
        %1008 = vst [vmem:[%s397 + $0x28] sm:$0xff] %v976
        %1009 = vst [vmem:[%s397 + $0x30] sm:$0xff] %v977
        %1010 = vst [vmem:[%s397 + $0x38] sm:$0xff] %v978
        %1011 = vst [vmem:[%s397 + $0x40] sm:$0xff] %v979
        %1012 = vst [vmem:[%s397 + $0x48] sm:$0xff] %v980
        %1013 = vst [vmem:[%s397 + $0x50] sm:$0xff] %v981
        %1014 = vst [vmem:[%s397 + $0x58] sm:$0xff] %v982
        %1015 = vst [vmem:[%s397 + $0x60] sm:$0xff] %v983
        %1016 = vst [vmem:[%s397 + $0x68] sm:$0xff] %v984
        %1017 = vst [vmem:[%s397 + $0x70] sm:$0xff] %v985
        %1018 = vst [vmem:[%s397 + $0x78] sm:$0xff] %v986
        %1019 = vst [vmem:[%s397 + $0x80] sm:$0xff] %v987
        %1020 = vst [vmem:[%s397 + $0x88] sm:$0xff] %v988
        %1021 = vst [vmem:[%s397 + $0x90] sm:$0xff] %v989
        %1022 = vst [vmem:[%s397 + $0x98] sm:$0xff] %v990
        %1023 = vst [vmem:[%s397 + $0xa0] sm:$0xff] %v991
        %1024 = vst [vmem:[%s397 + $0xa8] sm:$0xff] %v992
        %1025 = vst [vmem:[%s397 + $0xb0] sm:$0xff] %v993
        %1026 = vst [vmem:[%s397 + $0xb8] sm:$0xff] %v994
        %1027 = vst [vmem:[%s397 + $0xc0] sm:$0xff] %v995
        %1028 = vst [vmem:[%s397 + $0xc8] sm:$0xff] %v996
        %1029 = vst [vmem:[%s397 + $0xd0] sm:$0xff] %v997
        %1030 = vst [vmem:[%s397 + $0xd8] sm:$0xff] %v998
        %1031 = vst [vmem:[%s397 + $0xe0] sm:$0xff] %v999
        %1032 = vst [vmem:[%s397 + $0xe8] sm:$0xff] %v1000
        %1033 = vst [vmem:[%s397 + $0xf0] sm:$0xff] %v1001
        %1034 = vst [vmem:[%s397 + $0xf8] sm:$0xff] %v1002
        // Predicated region
        $region75: #{a_call__.1} parent=65 // pred_check
          %p1035 = pneg %p419
        $region76: #{a_call__.1} parent=65 // pred_check_branch
          %1037 = sbr.rel (%p1035) target = $region78
        $region77: #{a_call__.1} parent=65 // pred_region
          %v1038 = vld [vmem:[%s397] sm:$0xff]
          %v1039 = vld [vmem:[%s397 + $0x8] sm:$0xff]
          %v1040 = vld [vmem:[%s397 + $0x10] sm:$0xff]
          %v1041 = vld [vmem:[%s397 + $0x18] sm:$0xff]
          %v1042 = vld [vmem:[%s397 + $0x20] sm:$0xff]
          %v1043 = vld [vmem:[%s397 + $0x28] sm:$0xff]
          %v1044 = vld [vmem:[%s397 + $0x30] sm:$0xff]
          %v1045 = vld [vmem:[%s397 + $0x38] sm:$0xff]
          %v1046 = vld [vmem:[%s397 + $0x40] sm:$0xff]
          %v1047 = vld [vmem:[%s397 + $0x48] sm:$0xff]
          %v1048 = vld [vmem:[%s397 + $0x50] sm:$0xff]
          %v1049 = vld [vmem:[%s397 + $0x58] sm:$0xff]
          %v1050 = vld [vmem:[%s397 + $0x60] sm:$0xff]
          %v1051 = vld [vmem:[%s397 + $0x68] sm:$0xff]
          %v1052 = vld [vmem:[%s397 + $0x70] sm:$0xff]
          %v1053 = vld [vmem:[%s397 + $0x78] sm:$0xff]
          %v1054 = vld [vmem:[%s397 + $0x80] sm:$0xff]
          %v1055 = vld [vmem:[%s397 + $0x88] sm:$0xff]
          %v1056 = vld [vmem:[%s397 + $0x90] sm:$0xff]
          %v1057 = vld [vmem:[%s397 + $0x98] sm:$0xff]
          %v1058 = vld [vmem:[%s397 + $0xa0] sm:$0xff]
          %v1059 = vld [vmem:[%s397 + $0xa8] sm:$0xff]
          %v1060 = vld [vmem:[%s397 + $0xb0] sm:$0xff]
          %v1061 = vld [vmem:[%s397 + $0xb8] sm:$0xff]
          %v1062 = vld [vmem:[%s397 + $0xc0] sm:$0xff]
          %v1063 = vld [vmem:[%s397 + $0xc8] sm:$0xff]
          %v1064 = vld [vmem:[%s397 + $0xd0] sm:$0xff]
          %v1065 = vld [vmem:[%s397 + $0xd8] sm:$0xff]
          %v1066 = vld [vmem:[%s397 + $0xe0] sm:$0xff]
          %v1067 = vld [vmem:[%s397 + $0xe8] sm:$0xff]
          %v1068 = vld [vmem:[%s397 + $0xf0] sm:$0xff]
          %v1069 = vld [vmem:[%s397 + $0xf8] sm:$0xff]
          %v1070 = vld [vmem:[%s415] sm:$0x3]
          %v1072 = vperm.slane %v1070, 0
          %v1073 = vperm.slane %v1070, 1
          %v1076 = vadd.f32 %v1038, %v1072
          %v1077 = vadd.f32 %v1039, %v1073
          %v1078 = vadd.f32 %v1040, %v1072
          %v1079 = vadd.f32 %v1041, %v1073
          %v1080 = vadd.f32 %v1042, %v1072
          %v1081 = vadd.f32 %v1043, %v1073
          %v1082 = vadd.f32 %v1044, %v1072
          %v1083 = vadd.f32 %v1045, %v1073
          %v1084 = vadd.f32 %v1046, %v1072
          %v1085 = vadd.f32 %v1047, %v1073
          %v1086 = vadd.f32 %v1048, %v1072
          %v1087 = vadd.f32 %v1049, %v1073
          %v1088 = vadd.f32 %v1050, %v1072
          %v1089 = vadd.f32 %v1051, %v1073
          %v1090 = vadd.f32 %v1052, %v1072
          %v1091 = vadd.f32 %v1053, %v1073
          %v1092 = vadd.f32 %v1054, %v1072
          %v1093 = vadd.f32 %v1055, %v1073
          %v1094 = vadd.f32 %v1056, %v1072
          %v1095 = vadd.f32 %v1057, %v1073
          %v1096 = vadd.f32 %v1058, %v1072
          %v1097 = vadd.f32 %v1059, %v1073
          %v1098 = vadd.f32 %v1060, %v1072
          %v1099 = vadd.f32 %v1061, %v1073
          %v1100 = vadd.f32 %v1062, %v1072
          %v1101 = vadd.f32 %v1063, %v1073
          %v1102 = vadd.f32 %v1064, %v1072
          %v1103 = vadd.f32 %v1065, %v1073
          %v1104 = vadd.f32 %v1066, %v1072
          %v1105 = vadd.f32 %v1067, %v1073
          %v1106 = vadd.f32 %v1068, %v1072
          %v1107 = vadd.f32 %v1069, %v1073
          %v1108 = vmax.f32 %v1076, 0.0
          %v1109 = vmax.f32 %v1077, 0.0
          %v1110 = vmax.f32 %v1078, 0.0
          %v1111 = vmax.f32 %v1079, 0.0
          %v1112 = vmax.f32 %v1080, 0.0
          %v1113 = vmax.f32 %v1081, 0.0
          %v1114 = vmax.f32 %v1082, 0.0
          %v1115 = vmax.f32 %v1083, 0.0
          %v1116 = vmax.f32 %v1084, 0.0
          %v1117 = vmax.f32 %v1085, 0.0
          %v1118 = vmax.f32 %v1086, 0.0
          %v1119 = vmax.f32 %v1087, 0.0
          %v1120 = vmax.f32 %v1088, 0.0
          %v1121 = vmax.f32 %v1089, 0.0
          %v1122 = vmax.f32 %v1090, 0.0
          %v1123 = vmax.f32 %v1091, 0.0
          %v1124 = vmax.f32 %v1092, 0.0
          %v1125 = vmax.f32 %v1093, 0.0
          %v1126 = vmax.f32 %v1094, 0.0
          %v1127 = vmax.f32 %v1095, 0.0
          %v1128 = vmax.f32 %v1096, 0.0
          %v1129 = vmax.f32 %v1097, 0.0
          %v1130 = vmax.f32 %v1098, 0.0
          %v1131 = vmax.f32 %v1099, 0.0
          %v1132 = vmax.f32 %v1100, 0.0
          %v1133 = vmax.f32 %v1101, 0.0
          %v1134 = vmax.f32 %v1102, 0.0
          %v1135 = vmax.f32 %v1103, 0.0
          %v1136 = vmax.f32 %v1104, 0.0
          %v1137 = vmax.f32 %v1105, 0.0
          %v1138 = vmax.f32 %v1106, 0.0
          %v1139 = vmax.f32 %v1107, 0.0
          %1140 = vst [vmem:[%s397] sm:$0xff] %v1108
          %1141 = vst [vmem:[%s397 + $0x8] sm:$0xff] %v1109
          %1142 = vst [vmem:[%s397 + $0x10] sm:$0xff] %v1110
          %1143 = vst [vmem:[%s397 + $0x18] sm:$0xff] %v1111
          %1144 = vst [vmem:[%s397 + $0x20] sm:$0xff] %v1112
          %1145 = vst [vmem:[%s397 + $0x28] sm:$0xff] %v1113
          %1146 = vst [vmem:[%s397 + $0x30] sm:$0xff] %v1114
          %1147 = vst [vmem:[%s397 + $0x38] sm:$0xff] %v1115
          %1148 = vst [vmem:[%s397 + $0x40] sm:$0xff] %v1116
          %1149 = vst [vmem:[%s397 + $0x48] sm:$0xff] %v1117
          %1150 = vst [vmem:[%s397 + $0x50] sm:$0xff] %v1118
          %1151 = vst [vmem:[%s397 + $0x58] sm:$0xff] %v1119
          %1152 = vst [vmem:[%s397 + $0x60] sm:$0xff] %v1120
          %1153 = vst [vmem:[%s397 + $0x68] sm:$0xff] %v1121
          %1154 = vst [vmem:[%s397 + $0x70] sm:$0xff] %v1122
          %1155 = vst [vmem:[%s397 + $0x78] sm:$0xff] %v1123
          %1156 = vst [vmem:[%s397 + $0x80] sm:$0xff] %v1124
          %1157 = vst [vmem:[%s397 + $0x88] sm:$0xff] %v1125
          %1158 = vst [vmem:[%s397 + $0x90] sm:$0xff] %v1126
          %1159 = vst [vmem:[%s397 + $0x98] sm:$0xff] %v1127
          %1160 = vst [vmem:[%s397 + $0xa0] sm:$0xff] %v1128
          %1161 = vst [vmem:[%s397 + $0xa8] sm:$0xff] %v1129
          %1162 = vst [vmem:[%s397 + $0xb0] sm:$0xff] %v1130
          %1163 = vst [vmem:[%s397 + $0xb8] sm:$0xff] %v1131
          %1164 = vst [vmem:[%s397 + $0xc0] sm:$0xff] %v1132
          %1165 = vst [vmem:[%s397 + $0xc8] sm:$0xff] %v1133
          %1166 = vst [vmem:[%s397 + $0xd0] sm:$0xff] %v1134
          %1167 = vst [vmem:[%s397 + $0xd8] sm:$0xff] %v1135
          %1168 = vst [vmem:[%s397 + $0xe0] sm:$0xff] %v1136
          %1169 = vst [vmem:[%s397 + $0xe8] sm:$0xff] %v1137
          %1170 = vst [vmem:[%s397 + $0xf0] sm:$0xff] %v1138
          %1171 = vst [vmem:[%s397 + $0xf8] sm:$0xff] %v1139
        $region78: #{a_call__.1} parent=65 // pred_fallthru
          _
        %s1172 = sand.u32 %s128, 1
        %s1173 = scalar_lea.sflag [#allocation4], %s1172
        %s1174 = sand.u32 %s128, 1
        %s1175 = smul.addr %s1174, 256
        %s1176 = scalar_lea.vmem [#allocation3], %s1175
        // Predicated region
        $region79: #{a_call__.1} parent=65 // pred_check
          %p1177 = pneg %p138
        $region80: #{a_call__.1} parent=65 // pred_check_branch
          %1179 = sbr.rel (%p1177) target = $region82
        $region81: #{a_call__.1} parent=65 // pred_region
          %s1180 = smul.u32 16, %s22
          %s1181 = smul.u32 2, %s23
          %1183 = vsyncadd %s1173, 0
          %s1184 = smul.addr %s1180, 4
          %s1185 = sadd.s32 %s1181, %s1184
          %s1186 = smul.addr %s1185, 8
          %s1187 = scalar_lea.hbm %s3, %s1186
          %s1188 = sshll.u32 %s1176, 4
          %s1189 = int_to_ptr.vmem [resolvable:$true] %s1188
          %s1190 = sshll.u32 %s1187, 4
          %s1191 = int_to_ptr.hbm [resolvable:$true] %s1190
          %1196 = dma.vmem_to_hbm [thread:$0]  %s1189, 4096, %s1191, %s1173, 256, 512, 16
        $region82: #{a_call__.1} parent=65 // pred_fallthru
          _
      $region66: #{a_call__.1} parent=5 // pred_fallthru
        _
      %p1197 = scmp.le.s32.totalorder 2, %s12
      // Predicated region
      $region83: #{a_call__.1} parent=5 // pred_check
        %p1198 = pneg %p1197
      $region84: #{a_call__.1} parent=5 // pred_check_branch
        %1200 = sbr.rel (%p1198) target = $region86
      $region85: #{a_call__.1} parent=5 // pred_region
        %s1201 = ssub.s32 %s12, 2
        // Predicated region
        $region87: #{a_call__.1} parent=85 // pred_check
          %p1202 = pneg %p144
        $region88: #{a_call__.1} parent=85 // pred_check_branch
          %1204 = sbr.rel (%p1202) target = $region90
        $region89: #{a_call__.1} parent=85 // pred_region
          %s1205 = sand.u32 %s129, 1
          %s1206 = scalar_lea.sflag [#allocation4], %s1205
          %s1207 = sand.u32 %s129, 1
          %s1208 = smul.addr %s1207, 256
          %s1209 = scalar_lea.vmem [#allocation3], %s1208
          %1211 = dma.done %s1206, 4096
        $region90: #{a_call__.1} parent=85 // pred_fallthru
          _
      $region86: #{a_call__.1} parent=5 // pred_fallthru
        _
    $region6: #{a_call__.1} parent=1 // loop_footer
      %s16 = sadd.s32 1, %s12
    $region7: #{a_call__.1} parent=1 // loop_footer_branch
      %11 = sbr.rel target = $region3
    $region8: #{a_call__.1} parent=1 // loop_exit
      _
    %1212 = vsyncpa [#allocation4], 1
    %s1213 = scalar_lea.sflag [#allocation4], 1
    %1214 = vsyncpa %s1213, 1

</llo_original>
